<compile_context>
chip_gen: v7x
topology: tpu7x:2x2x1
jax: 0.10.0
libtpu: 0.0.40
codegen_flags: <defaults>
</compile_context>

<pallas_src>
import functools
import math

import jax
import jax.numpy as jnp
from jax import lax
from jax.experimental import pallas as pl
from jax.experimental.pallas import tpu as pltpu

_MIB = 1 << 20


# ---------------------------------------------------------------------------
# Small helpers
# ---------------------------------------------------------------------------

def _round_up(x, m):
    return ((x + m - 1) // m) * m


def _cdiv(a, b):
    return -(-a // b)


def _pad_to(a, shape):
    pads = [(0, t - s) for s, t in zip(a.shape, shape)]
    if all(p == (0, 0) for p in pads):
        return a
    return jnp.pad(a, pads)


def _sublane(dtype):
    # Rows per packed sublane group: f32 -> 8, bf16 -> 16, int8/fp8 -> 32.
    return max(8, 32 // max(jnp.dtype(dtype).itemsize, 1))


def _tpu_generation():
    try:
        kind = jax.devices()[0].device_kind.lower()
    except Exception:
        return 6
    if "v7" in kind or "7x" in kind:
        return 7
    if "v6" in kind:
        return 6
    if "v5" in kind:
        return 5
    return 6


def _vmem_caps(gen):
    """(scoped VMEM cap, per-x-tile byte target) for this generation."""
    if gen >= 7:     # 64 MiB physical per TensorCore -> stay well below it.
        return 48 * _MIB, 8 * _MIB
    return 64 * _MIB, 12 * _MIB


# ---------------------------------------------------------------------------
# In-kernel head math (pooled (tb, D) f32 -> logits (tb, Cp) f32)
# ---------------------------------------------------------------------------

def _single_head(pooled_f32, wt_ref, b_ref):
    wt = wt_ref[...]                                     # (D, Cp), VMEM-resident
    out = jnp.dot(pooled_f32.astype(wt.dtype), wt,
                  preferred_element_type=jnp.float32)
    return out + b_ref[...].astype(jnp.float32)          # (1, Cp) broadcasts


def _mlp_head(pooled_f32, w1t_ref, b1_ref, w2t_ref, b2_ref):
    w1t = w1t_ref[...]                                   # (D, Rp)
    h = jnp.dot(pooled_f32.astype(w1t.dtype), w1t,
                preferred_element_type=jnp.float32)
    h = jnp.tanh(h + b1_ref[...].astype(jnp.float32))
    w2t = w2t_ref[...]                                   # (Rp, Cp)
    out = jnp.dot(h.astype(w2t.dtype), w2t,
                  preferred_element_type=jnp.float32)
    return out + b2_ref[...].astype(jnp.float32)


# ---------------------------------------------------------------------------
# Kernels
# ---------------------------------------------------------------------------

# CLS-head path: x already pooled outside (token 0 only), grid over batch.
def _cls_single_kernel(x_ref, wt_ref, b_ref, o_ref):
    pooled = x_ref[...].astype(jnp.float32)              # (tb, D)
    o_ref[...] = _single_head(pooled, wt_ref, b_ref).astype(o_ref.dtype)


def _cls_mlp_kernel(x_ref, w1t_ref, b1_ref, w2t_ref, b2_ref, o_ref):
    pooled = x_ref[...].astype(jnp.float32)
    o_ref[...] = _mlp_head(pooled, w1t_ref, b1_ref,
                           w2t_ref, b2_ref).astype(o_ref.dtype)


# Mean-pool path: grid = (batch tiles, seq tiles); sequence axis is a
# reduction accumulated into a (tb, D) f32 VMEM scratch.  The ragged last
# sequence tile is masked in-kernel (its out-of-bounds rows are undefined);
# ragged batch rows produce garbage output rows that the wrapper slices off.
def _mean_pool_step(seq_len, ts, mask_seq, x_ref, acc_ref):
    s = pl.program_id(1)

    @pl.when(s == 0)
    def _():
        acc_ref[...] = jnp.zeros_like(acc_ref)

    x = x_ref[...].astype(jnp.float32)                   # (tb, ts, D)
    if mask_seq:
        row = lax.broadcasted_iota(jnp.int32, (ts, x.shape[-1]), 0)
        x = jnp.where(row < seq_len - s * ts, x, 0.0)
    acc_ref[...] += jnp.sum(x, axis=1)


def _mean_single_kernel(inv_s, seq_len, ts, mask_seq,
                        x_ref, wt_ref, b_ref, o_ref, acc_ref):
    _mean_pool_step(seq_len, ts, mask_seq, x_ref, acc_ref)

    @pl.when(pl.program_id(1) == pl.num_programs(1) - 1)
    def _():
        pooled = acc_ref[...] * inv_s                     # divide by true S
        o_ref[...] = _single_head(pooled, wt_ref, b_ref).astype(o_ref.dtype)


def _mean_mlp_kernel(inv_s, seq_len, ts, mask_seq,
                     x_ref, w1t_ref, b1_ref, w2t_ref, b2_ref, o_ref, acc_ref):
    _mean_pool_step(seq_len, ts, mask_seq, x_ref, acc_ref)

    @pl.when(pl.program_id(1) == pl.num_programs(1) - 1)
    def _():
        pooled = acc_ref[...] * inv_s
        o_ref[...] = _mlp_head(pooled, w1t_ref, b1_ref,
                               w2t_ref, b2_ref).astype(o_ref.dtype)


# ---------------------------------------------------------------------------
# Tile planning
# ---------------------------------------------------------------------------

def _pick_tb(B, sub, gen):
    # 256-wide M matches the 256x256 MXU on v6e/v7x when B is large; v5e keeps 128.
    max_tb = 256 if (gen >= 6 and B >= 256) else 128
    tb = min(_round_up(B, sub), max_tb)
    # v7x has 2 TensorCores/chip: make sure the "parallel" batch axis has at
    # least 2 tiles so both cores get work.  Neutral on single-TC v5e/v6e.
    if gen >= 7 and _cdiv(B, tb) < 2 and B >= 2 * sub:
        tb = _round_up(_cdiv(B, 2), sub)
    return tb


def _plan_mean_tiles(B, S, D, x_itemsize, out_itemsize, weight_bytes, Cp, sub,
                     gen, max_seq_tile=None):
    vmem_cap, x_target = _vmem_caps(gen)
    margin = 4 * _MIB
    tb = _pick_tb(B, sub, gen)

    def x_budget(tb_):
        fixed = weight_bytes + tb_ * D * 4 + 2 * tb_ * Cp * out_itemsize + margin
        return vmem_cap - fixed

    # Shrink tb (never below one sublane group) before letting ts hit its
    # floor when D is very large: keeps the double-buffered x tile in VMEM.
    while tb > sub and 2 * tb * sub * D * x_itemsize > x_budget(tb):
        tb = max(sub, _round_up(tb // 2, sub))

    per_buf = min(x_target, max(x_budget(tb) // 2, tb * sub * D * x_itemsize))
    ts = (per_buf // (tb * D * x_itemsize)) // sub * sub
    ts = max(sub, min(ts, _round_up(S, sub)))
    if max_seq_tile is not None:                          # test/tuning override
        ts = max(sub, min(ts, (max_seq_tile // sub) * sub))

    needed = (weight_bytes + tb * D * 4 + 2 * tb * ts * D * x_itemsize
              + 2 * tb * Cp * out_itemsize + 8 * _MIB)
    vmem_limit = int(min(vmem_cap, max(needed, 32 * _MIB)))
    return tb, ts, vmem_limit


def _plan_cls(B, D, x_itemsize, out_itemsize, weight_bytes, Cp, sub, gen):
    vmem_cap, _ = _vmem_caps(gen)
    tb = _pick_tb(B, sub, gen)
    needed = (weight_bytes + 2 * tb * D * x_itemsize
              + 2 * tb * Cp * out_itemsize + 8 * _MIB)
    vmem_limit = int(min(vmem_cap, max(needed, 32 * _MIB)))
    return tb, vmem_limit


# ---------------------------------------------------------------------------
# Parameter preparation (hoisted out of the per-forward path)
# ---------------------------------------------------------------------------

def prepare_output_layer_params(params, weights_dtype=None):
    """One-time transpose + lane-pad of PyTorch-layout Linear weights.

    The result can be cached and reused across forwards so the transpose/pad
    is not re-paid per call.  `weights_dtype=jnp.bfloat16` is recommended on
    v6e/v7x: it halves the resident weight VMEM + one-time weight DMA and hits
    the native MXU path (the kernel keeps f32 accumulation); it introduces a
    small bf16 rounding deviation from the f32 PyTorch reference.
    """
    mlp = "w2" in params
    if mlp:
        w1, b1, w2, b2 = params["w1"], params["b1"], params["w2"], params["b2"]
        R, D = w1.shape
        C = w2.shape[0]
        Rp, Cp = _round_up(R, 128), _round_up(C, 128)
        weights = (_pad_to(w1.T, (D, Rp)),
                   _pad_to(b1.reshape(1, R), (1, Rp)),
                   _pad_to(w2.T, (Rp, Cp)),
                   _pad_to(b2.reshape(1, C), (1, Cp)))
    else:
        w, b = params["w"], params["b"]
        C, D = w.shape
        Cp = _round_up(C, 128)
        weights = (_pad_to(w.T, (D, Cp)),
                   _pad_to(b.reshape(1, C), (1, Cp)))
    if weights_dtype is not None:
        weights = tuple(a.astype(weights_dtype) for a in weights)
    return {"_prepared": True, "mlp": mlp, "num_classes": C,
            "embedding_dim": D, "weights": weights}


# ---------------------------------------------------------------------------
# Forward
# ---------------------------------------------------------------------------

def _reference(x, params, cls_head):
    pooled = x[:, 0, :] if cls_head else jnp.mean(x, axis=1)
    if "w2" in params:
        h = jnp.tanh(pooled @ params["w1"].T + params["b1"])
        return h @ params["w2"].T + params["b2"]
    return pooled @ params["w"].T + params["b"]


def _pallas_forward(x, prep, cls_head, gen, single_buffer_weights,
                    max_seq_tile=None):
    B, S, D = x.shape
    out_dtype = x.dtype
    weights = prep["weights"]
    mlp = prep["mlp"]
    C = prep["num_classes"]
    Cp = weights[-1].shape[-1]
    sub = _sublane(x.dtype)
    x_itemsize = jnp.dtype(x.dtype).itemsize
    out_itemsize = jnp.dtype(out_dtype).itemsize
    # Budget weights as double-buffered so the Buffered(1) fallback also fits.
    weight_bytes = 2 * sum(int(w.size) * w.dtype.itemsize for w in weights)

    def weight_spec(shape, idx):
        if single_buffer_weights:
            # Constant-index blocks never re-DMA: single-buffer to free VMEM.
            return pl.BlockSpec(shape, idx, pipeline_mode=pl.Buffered(1))
        return pl.BlockSpec(shape, idx)

    if cls_head:
        tb, vmem_limit = _plan_cls(B, D, x_itemsize, out_itemsize,
                                   weight_bytes, Cp, sub, gen)
        # Only token 0 is needed -> never DMA the rest of the sequence.
        pooled_in = x[:, 0, :]
        kernel = _cls_mlp_kernel if mlp else _cls_single_kernel
        idx_const = lambda i: (0, 0)
        in_specs = ([pl.BlockSpec((tb, D), lambda i: (i, 0))]
                    + [weight_spec(w.shape, idx_const) for w in weights])
        out_specs = pl.BlockSpec((tb, Cp), lambda i: (i, 0))
        grid = (_cdiv(B, tb),)
        dim_sem = ("parallel",)
        scratch = []
        args = (pooled_in,) + weights
    else:
        tb, ts, vmem_limit = _plan_mean_tiles(
            B, S, D, x_itemsize, out_itemsize, weight_bytes, Cp, sub, gen,
            max_seq_tile=max_seq_tile)
        mask_seq = (S % ts) != 0
        kernel = functools.partial(
            _mean_mlp_kernel if mlp else _mean_single_kernel,
            1.0 / float(S), S, ts, mask_seq)
        idx_const = lambda i, s: (0, 0)
        in_specs = ([pl.BlockSpec((tb, ts, D), lambda i, s: (i, s, 0))]
                    + [weight_spec(w.shape, idx_const) for w in weights])
        out_specs = pl.BlockSpec((tb, Cp), lambda i, s: (i, 0))
        grid = (_cdiv(B, tb), _cdiv(S, ts))
        dim_sem = ("parallel", "arbitrary")
        scratch = [pltpu.VMEM((tb, D), jnp.float32)]
        args = (x,) + weights

    out = pl.pallas_call(
        kernel,
        out_shape=jax.ShapeDtypeStruct((B, Cp), out_dtype),
        grid_spec=pltpu.PrefetchScalarGridSpec(
            num_scalar_prefetch=0,
            grid=grid,
            in_specs=in_specs,
            out_specs=out_specs,
            scratch_shapes=scratch,
        ),
        compiler_params=pltpu.CompilerParams(
            dimension_semantics=dim_sem,
            vmem_limit_bytes=vmem_limit,
        ),
    )(*args)
    return out[:, :C]


def output_layer_forward(x, params, *, cls_head=False, force_pallas=False,
                         weights_dtype=None, max_seq_tile=None):
    """x: (B, S, D).  params: PyTorch-layout weights (out_features, in_features)
    or a prepared dict from prepare_output_layer_params()."""
    B, S, D = x.shape
    prepared = isinstance(params, dict) and params.get("_prepared", False)

    # Tiny heads: pallas_call launch + per-grid-step overhead dominates; XLA
    # fusion is already optimal there.  The test forces the Pallas path.
    if not prepared and not force_pallas and B * S * D < (1 << 16):
        return _reference(x, params, cls_head)

    prep = params if prepared else prepare_output_layer_params(
        params, weights_dtype=weights_dtype)
    gen = _tpu_generation()
    try:
        return _pallas_forward(x, prep, cls_head, gen,
                               single_buffer_weights=True,
                               max_seq_tile=max_seq_tile)
    except Exception:
        # Fallback if this JAX build rejects pipeline_mode=pl.Buffered(1).
        return _pallas_forward(x, prep, cls_head, gen,
                               single_buffer_weights=False,
                               max_seq_tile=max_seq_tile)


# ---------------------------------------------------------------------------
# Deterministic parameter init (mirrors OutputLayer.__init__ + _init_weights)
# ---------------------------------------------------------------------------

def init_output_layer_params(key, embedding_dim, num_classes=12,
                             representation_size=None):
    params = {}
    if representation_size:
        k1, k2 = jax.random.split(key)
        bound = 1.0 / math.sqrt(embedding_dim)
        params["w1"] = jax.random.uniform(
            k1, (representation_size, embedding_dim),
            minval=-bound, maxval=bound, dtype=jnp.float32)
        params["b1"] = jax.random.uniform(
            k2, (representation_size,),
            minval=-bound, maxval=bound, dtype=jnp.float32)
        # Final Linear (out_features == num_classes): zero init, per _init_weights.
        params["w2"] = jnp.zeros((num_classes, representation_size), jnp.float32)
        params["b2"] = jnp.zeros((num_classes,), jnp.float32)
    else:
        # Single Linear (out_features == num_classes): zero init.
        params["w"] = jnp.zeros((num_classes, embedding_dim), jnp.float32)
        params["b"] = jnp.zeros((num_classes,), jnp.float32)
    return params


if __name__ == "__main__":
    key = jax.random.PRNGKey(0)
    kx, kp, kw, kb, kx2, kx4, k4 = jax.random.split(key, 7)

    # --- Config 1: mean-pooling head with representation MLP (zero-init final)
    B, S, D = 2, 8, 32
    C, R = 12, 24
    x = jax.random.normal(kx, (B, S, D), dtype=jnp.float32)
    params_mlp = init_output_layer_params(kp, D, num_classes=C,
                                          representation_size=R)
    out1 = jax.block_until_ready(
        output_layer_forward(x, params_mlp, cls_head=False, force_pallas=True))
    ref1 = _reference(x, params_mlp, cls_head=False)
    assert out1.shape == (B, C)
    assert jnp.allclose(out1, ref1, atol=1e-4), "MLP mean-pool head mismatch"

    # --- Config 2: CLS-token head, single (zero-initialized) Linear ---------
    params_single = init_output_layer_params(kp, D, num_classes=C,
                                             representation_size=None)
    out2 = jax.block_until_ready(
        output_layer_forward(x, params_single, cls_head=True, force_pallas=True))
    ref2 = _reference(x, params_single, cls_head=True)
    assert out2.shape == (B, C)
    assert jnp.allclose(out2, ref2, atol=1e-4), "CLS-head mismatch"

    # --- Config 3: random weights, ragged B and S, prepared (cached) params -
    B3, S3, D3 = 5, 13, 48
    x3 = jax.random.normal(kx2, (B3, S3, D3), dtype=jnp.float32)
    bound = 1.0 / math.sqrt(D3)
    params_rand = {
        "w": jax.random.uniform(kw, (C, D3), minval=-bound, maxval=bound,
                                dtype=jnp.float32),
        "b": jax.random.uniform(kb, (C,), minval=-bound, maxval=bound,
                                dtype=jnp.float32),
    }
    prep_rand = prepare_output_layer_params(params_rand)
    out3m = jax.block_until_ready(
        output_layer_forward(x3, prep_rand, cls_head=False, force_pallas=True))
    out3c = jax.block_until_ready(
        output_layer_forward(x3, prep_rand, cls_head=True, force_pallas=True))
    assert jnp.allclose(out3m, _reference(x3, params_rand, cls_head=False),
                        atol=1e-4), "ragged mean-pool mismatch"
    assert jnp.allclose(out3c, _reference(x3, params_rand, cls_head=True),
                        atol=1e-4), "ragged CLS mismatch"

    # --- Config 4: multi-tile sequence reduction + ragged-tail masking ------
    B4, S4, D4, R4 = 4, 20, 32, 20
    x4 = jax.random.normal(kx4, (B4, S4, D4), dtype=jnp.float32)
    k41, k42, k43, k44 = jax.random.split(k4, 4)
    b4 = 1.0 / math.sqrt(D4)
    params4 = {
        "w1": jax.random.uniform(k41, (R4, D4), minval=-b4, maxval=b4,
                                 dtype=jnp.float32),
        "b1": jax.random.uniform(k42, (R4,), minval=-b4, maxval=b4,
                                 dtype=jnp.float32),
        "w2": jax.random.uniform(k43, (C, R4), minval=-b4, maxval=b4,
                                 dtype=jnp.float32),
        "b2": jax.random.uniform(k44, (C,), minval=-b4, maxval=b4,
                                 dtype=jnp.float32),
    }
    out4 = jax.block_until_ready(
        output_layer_forward(x4, params4, cls_head=False, force_pallas=True,
                             max_seq_tile=8))
    ref4 = _reference(x4, params4, cls_head=False)
    assert jnp.allclose(out4, ref4, atol=1e-4), "multi-tile mean-pool mismatch"

    print("KERNEL_OK")
</pallas_src>

<mosaic_0001>
module attributes {stable_mosaic.version = 11 : i64} {
  func.func @_mean_mlp_kernel(%arg0: i32, %arg1: i32, %arg2: memref<8x8x32xf32, #tpu.memory_space<vmem>>, %arg3: memref<32x128xf32, #tpu.memory_space<vmem>>, %arg4: memref<1x128xf32, #tpu.memory_space<vmem>>, %arg5: memref<128x128xf32, #tpu.memory_space<vmem>>, %arg6: memref<1x128xf32, #tpu.memory_space<vmem>>, %arg7: memref<8x128xf32, #tpu.memory_space<vmem>>, %arg8: memref<8x32xf32, #tpu.memory_space<vmem>>) attributes {dimension_semantics = [#tpu.dimension_semantics<parallel>, #tpu.dimension_semantics<arbitrary>], iteration_bounds = array<i64: 1, 1>, scalar_prefetch = 0 : i64, scratch_operands = 1 : i64, tpu.core_type = #tpu.core_type<tc>, window_params = [{transform_indices = @transform_0, window_bounds = array<i64: 8, 8, 32>}, {pipeline_mode = #tpu.pipeline_mode<synchronous>, transform_indices = @transform_1, window_bounds = array<i64: 32, 128>}, {pipeline_mode = #tpu.pipeline_mode<synchronous>, transform_indices = @transform_2, window_bounds = array<i64: 1, 128>}, {pipeline_mode = #tpu.pipeline_mode<synchronous>, transform_indices = @transform_3, window_bounds = array<i64: 128, 128>}, {pipeline_mode = #tpu.pipeline_mode<synchronous>, transform_indices = @transform_4, window_bounds = array<i64: 1, 128>}, {transform_indices = @transform_5, window_bounds = array<i64: 8, 128>}]} {
    %c0_i32 = arith.constant 0 : i32
    %0 = arith.cmpi eq, %arg1, %c0_i32 : i32
    %1 = arith.extui %0 : i1 to i32
    %c0_i32_0 = arith.constant 0 : i32
    %2 = arith.cmpi ne, %1, %c0_i32_0 : i32
    scf.if %2 {
      %cst_9 = arith.constant 0.000000e+00 : f32
      %11 = vector.broadcast %cst_9 : f32 to vector<8x32xf32>
      %c0_10 = arith.constant 0 : index
      %c0_11 = arith.constant 0 : index
      %12 = vector.load %arg8[%c0_10, %c0_11] : memref<8x32xf32, #tpu.memory_space<vmem>>, vector<8x32xf32>
      tpu.vector_store %arg8[%c0_10, %c0_11], %11 {strides = array<i32>} : memref<8x32xf32, #tpu.memory_space<vmem>>, vector<8x32xf32>,
    } else {
    }
    %c0 = arith.constant 0 : index
    %c0_1 = arith.constant 0 : index
    %c0_2 = arith.constant 0 : index
    %3 = vector.load %arg2[%c0, %c0_1, %c0_2] : memref<8x8x32xf32, #tpu.memory_space<vmem>>, vector<8x8x32xf32>
    %c0_3 = arith.constant 0 : index
    %c0_4 = arith.constant 0 : index
    %4 = vector.load %arg8[%c0_3, %c0_4] : memref<8x32xf32, #tpu.memory_space<vmem>>, vector<8x32xf32>
    %cst = arith.constant dense<0.000000e+00> : vector<8x32xf32>
    %5 = vector.multi_reduction <add>, %3, %cst [1] : vector<8x8x32xf32> to vector<8x32xf32>
    %6 = arith.addf %4, %5 : vector<8x32xf32>
    %c0_5 = arith.constant 0 : index
    %c0_6 = arith.constant 0 : index
    %7 = vector.load %arg8[%c0_5, %c0_6] : memref<8x32xf32, #tpu.memory_space<vmem>>, vector<8x32xf32>
    tpu.vector_store %arg8[%c0_5, %c0_6], %6 {strides = array<i32>} : memref<8x32xf32, #tpu.memory_space<vmem>>, vector<8x32xf32>,
    %c0_i32_7 = arith.constant 0 : i32
    %8 = arith.cmpi eq, %arg1, %c0_i32_7 : i32
    %9 = arith.extui %8 : i1 to i32
    %c0_i32_8 = arith.constant 0 : i32
    %10 = arith.cmpi ne, %9, %c0_i32_8 : i32
    scf.if %10 {
      %c0_9 = arith.constant 0 : index
      %c0_10 = arith.constant 0 : index
      %11 = vector.load %arg8[%c0_9, %c0_10] : memref<8x32xf32, #tpu.memory_space<vmem>>, vector<8x32xf32>
      %cst_11 = arith.constant 1.250000e-01 : f32
      %12 = vector.broadcast %cst_11 : f32 to vector<8x32xf32>
      %13 = arith.mulf %11, %12 : vector<8x32xf32>
      %c0_12 = arith.constant 0 : index
      %c0_13 = arith.constant 0 : index
      %14 = vector.load %arg3[%c0_12, %c0_13] : memref<32x128xf32, #tpu.memory_space<vmem>>, vector<32x128xf32>
      %cst_14 = arith.constant dense<0.000000e+00> : vector<8x128xf32>
      %15 = tpu.matmul %13, %14, %cst_14 {dimension_numbers = #tpu.dot_dimension_numbers<[1], [0], [0], [1], [0, 0, 1, 1], [], []>} : vector<8x32xf32>, vector<32x128xf32>, vector<8x128xf32> -> vector<8x128xf32>
      %c0_15 = arith.constant 0 : index
      %c0_16 = arith.constant 0 : index
      %16 = vector.load %arg4[%c0_15, %c0_16] : memref<1x128xf32, #tpu.memory_space<vmem>>, vector<1x128xf32>
      %17 = vector.broadcast %16 : vector<1x128xf32> to vector<8x128xf32>
      %18 = arith.addf %15, %17 : vector<8x128xf32>
      %19 = math.tanh %18 : vector<8x128xf32>
      %c0_17 = arith.constant 0 : index
      %c0_18 = arith.constant 0 : index
      %20 = vector.load %arg5[%c0_17, %c0_18] : memref<128x128xf32, #tpu.memory_space<vmem>>, vector<128x128xf32>
      %cst_19 = arith.constant dense<0.000000e+00> : vector<8x128xf32>
      %21 = tpu.matmul %19, %20, %cst_19 {dimension_numbers = #tpu.dot_dimension_numbers<[1], [0], [0], [1], [0, 0, 1, 1], [], []>} : vector<8x128xf32>, vector<128x128xf32>, vector<8x128xf32> -> vector<8x128xf32>
      %c0_20 = arith.constant 0 : index
      %c0_21 = arith.constant 0 : index
      %22 = vector.load %arg6[%c0_20, %c0_21] : memref<1x128xf32, #tpu.memory_space<vmem>>, vector<1x128xf32>
      %23 = vector.broadcast %22 : vector<1x128xf32> to vector<8x128xf32>
      %24 = arith.addf %21, %23 : vector<8x128xf32>
      %c0_22 = arith.constant 0 : index
      %c0_23 = arith.constant 0 : index
      %25 = vector.load %arg7[%c0_22, %c0_23] : memref<8x128xf32, #tpu.memory_space<vmem>>, vector<8x128xf32>
      tpu.vector_store %arg7[%c0_22, %c0_23], %24 {strides = array<i32>} : memref<8x128xf32, #tpu.memory_space<vmem>>, vector<8x128xf32>,
    } else {
    }
    return
  }
  func.func @transform_0(%arg0: i32, %arg1: i32) -> (i32, i32, i32) {
    %c0_i32 = arith.constant 0 : i32
    %c0_i32_0 = arith.constant 0 : i32
    return %arg0, %arg1, %c0_i32 : i32, i32, i32
  }
  func.func @transform_1(%arg0: i32, %arg1: i32) -> (i32, i32) {
    %c0_i32 = arith.constant 0 : i32
    %c0_i32_0 = arith.constant 0 : i32
    %c0_i32_1 = arith.constant 0 : i32
    return %c0_i32, %c0_i32_0 : i32, i32
  }
  func.func @transform_2(%arg0: i32, %arg1: i32) -> (i32, i32) {
    %c0_i32 = arith.constant 0 : i32
    %c0_i32_0 = arith.constant 0 : i32
    %c0_i32_1 = arith.constant 0 : i32
    return %c0_i32, %c0_i32_0 : i32, i32
  }
  func.func @transform_3(%arg0: i32, %arg1: i32) -> (i32, i32) {
    %c0_i32 = arith.constant 0 : i32
    %c0_i32_0 = arith.constant 0 : i32
    %c0_i32_1 = arith.constant 0 : i32
    return %c0_i32, %c0_i32_0 : i32, i32
  }
  func.func @transform_4(%arg0: i32, %arg1: i32) -> (i32, i32) {
    %c0_i32 = arith.constant 0 : i32
    %c0_i32_0 = arith.constant 0 : i32
    %c0_i32_1 = arith.constant 0 : i32
    return %c0_i32, %c0_i32_0 : i32, i32
  }
  func.func @transform_5(%arg0: i32, %arg1: i32) -> (i32, i32) {
    %c0_i32 = arith.constant 0 : i32
    %c0_i32_0 = arith.constant 0 : i32
    return %arg0, %c0_i32 : i32, i32
  }
}

module attributes {stable_mosaic.version = 11 : i64} {
  func.func @_mean_mlp_kernel(%arg0: i32, %arg1: i32, %arg2: memref<8x8x32xf32, #tpu.memory_space<vmem>>, %arg3: memref<32x128xf32, #tpu.memory_space<vmem>>, %arg4: memref<1x128xf32, #tpu.memory_space<vmem>>, %arg5: memref<128x128xf32, #tpu.memory_space<vmem>>, %arg6: memref<1x128xf32, #tpu.memory_space<vmem>>, %arg7: memref<8x128xf32, #tpu.memory_space<vmem>>, %arg8: memref<8x32xf32, #tpu.memory_space<vmem>>) attributes {dimension_semantics = [#tpu.dimension_semantics<parallel>, #tpu.dimension_semantics<arbitrary>], iteration_bounds = array<i64: 1, 1>, scalar_prefetch = 0 : i64, scratch_operands = 1 : i64, tpu.core_type = #tpu.core_type<tc>, window_params = [{transform_indices = @transform_0, window_bounds = array<i64: 8, 8, 32>}, {pipeline_mode = #tpu.pipeline_mode<synchronous>, transform_indices = @transform_1, window_bounds = array<i64: 32, 128>}, {pipeline_mode = #tpu.pipeline_mode<synchronous>, transform_indices = @transform_2, window_bounds = array<i64: 1, 128>}, {pipeline_mode = #tpu.pipeline_mode<synchronous>, transform_indices = @transform_3, window_bounds = array<i64: 128, 128>}, {pipeline_mode = #tpu.pipeline_mode<synchronous>, transform_indices = @transform_4, window_bounds = array<i64: 1, 128>}, {transform_indices = @transform_5, window_bounds = array<i64: 8, 128>}]} {
    %c0_i32 = arith.constant 0 : i32
    %0 = arith.cmpi eq, %arg1, %c0_i32 : i32
    %1 = arith.extui %0 : i1 to i32
    %c0_i32_0 = arith.constant 0 : i32
    %2 = arith.cmpi ne, %1, %c0_i32_0 : i32
    scf.if %2 {
      %cst_9 = arith.constant 0.000000e+00 : f32
      %11 = vector.broadcast %cst_9 : f32 to vector<8x32xf32>
      %c0_10 = arith.constant 0 : index
      %c0_11 = arith.constant 0 : index
      %12 = vector.load %arg8[%c0_10, %c0_11] : memref<8x32xf32, #tpu.memory_space<vmem>>, vector<8x32xf32>
      tpu.vector_store %arg8[%c0_10, %c0_11], %11 {strides = array<i32>} : memref<8x32xf32, #tpu.memory_space<vmem>>, vector<8x32xf32>,
    } else {
    }
    %c0 = arith.constant 0 : index
    %c0_1 = arith.constant 0 : index
    %c0_2 = arith.constant 0 : index
    %3 = vector.load %arg2[%c0, %c0_1, %c0_2] : memref<8x8x32xf32, #tpu.memory_space<vmem>>, vector<8x8x32xf32>
    %c0_3 = arith.constant 0 : index
    %c0_4 = arith.constant 0 : index
    %4 = vector.load %arg8[%c0_3, %c0_4] : memref<8x32xf32, #tpu.memory_space<vmem>>, vector<8x32xf32>
    %cst = arith.constant dense<0.000000e+00> : vector<8x32xf32>
    %5 = vector.multi_reduction <add>, %3, %cst [1] : vector<8x8x32xf32> to vector<8x32xf32>
    %6 = arith.addf %4, %5 : vector<8x32xf32>
    %c0_5 = arith.constant 0 : index
    %c0_6 = arith.constant 0 : index
    %7 = vector.load %arg8[%c0_5, %c0_6] : memref<8x32xf32, #tpu.memory_space<vmem>>, vector<8x32xf32>
    tpu.vector_store %arg8[%c0_5, %c0_6], %6 {strides = array<i32>} : memref<8x32xf32, #tpu.memory_space<vmem>>, vector<8x32xf32>,
    %c0_i32_7 = arith.constant 0 : i32
    %8 = arith.cmpi eq, %arg1, %c0_i32_7 : i32
    %9 = arith.extui %8 : i1 to i32
    %c0_i32_8 = arith.constant 0 : i32
    %10 = arith.cmpi ne, %9, %c0_i32_8 : i32
    scf.if %10 {
      %c0_9 = arith.constant 0 : index
      %c0_10 = arith.constant 0 : index
      %11 = vector.load %arg8[%c0_9, %c0_10] : memref<8x32xf32, #tpu.memory_space<vmem>>, vector<8x32xf32>
      %cst_11 = arith.constant 1.250000e-01 : f32
      %12 = vector.broadcast %cst_11 : f32 to vector<8x32xf32>
      %13 = arith.mulf %11, %12 : vector<8x32xf32>
      %c0_12 = arith.constant 0 : index
      %c0_13 = arith.constant 0 : index
      %14 = vector.load %arg3[%c0_12, %c0_13] : memref<32x128xf32, #tpu.memory_space<vmem>>, vector<32x128xf32>
      %cst_14 = arith.constant dense<0.000000e+00> : vector<8x128xf32>
      %15 = tpu.matmul %13, %14, %cst_14 {dimension_numbers = #tpu.dot_dimension_numbers<[1], [0], [0], [1], [0, 0, 1, 1], [], []>} : vector<8x32xf32>, vector<32x128xf32>, vector<8x128xf32> -> vector<8x128xf32>
      %c0_15 = arith.constant 0 : index
      %c0_16 = arith.constant 0 : index
      %16 = vector.load %arg4[%c0_15, %c0_16] : memref<1x128xf32, #tpu.memory_space<vmem>>, vector<1x128xf32>
      %17 = vector.broadcast %16 : vector<1x128xf32> to vector<8x128xf32>
      %18 = arith.addf %15, %17 : vector<8x128xf32>
      %19 = math.tanh %18 : vector<8x128xf32>
      %c0_17 = arith.constant 0 : index
      %c0_18 = arith.constant 0 : index
      %20 = vector.load %arg5[%c0_17, %c0_18] : memref<128x128xf32, #tpu.memory_space<vmem>>, vector<128x128xf32>
      %cst_19 = arith.constant dense<0.000000e+00> : vector<8x128xf32>
      %21 = tpu.matmul %19, %20, %cst_19 {dimension_numbers = #tpu.dot_dimension_numbers<[1], [0], [0], [1], [0, 0, 1, 1], [], []>} : vector<8x128xf32>, vector<128x128xf32>, vector<8x128xf32> -> vector<8x128xf32>
      %c0_20 = arith.constant 0 : index
      %c0_21 = arith.constant 0 : index
      %22 = vector.load %arg6[%c0_20, %c0_21] : memref<1x128xf32, #tpu.memory_space<vmem>>, vector<1x128xf32>
      %23 = vector.broadcast %22 : vector<1x128xf32> to vector<8x128xf32>
      %24 = arith.addf %21, %23 : vector<8x128xf32>
      %c0_22 = arith.constant 0 : index
      %c0_23 = arith.constant 0 : index
      %25 = vector.load %arg7[%c0_22, %c0_23] : memref<8x128xf32, #tpu.memory_space<vmem>>, vector<8x128xf32>
      tpu.vector_store %arg7[%c0_22, %c0_23], %24 {strides = array<i32>} : memref<8x128xf32, #tpu.memory_space<vmem>>, vector<8x128xf32>,
    } else {
    }
    return
  }
  func.func @transform_0(%arg0: i32, %arg1: i32) -> (i32, i32, i32) {
    %c0_i32 = arith.constant 0 : i32
    %c0_i32_0 = arith.constant 0 : i32
    return %arg0, %arg1, %c0_i32 : i32, i32, i32
  }
  func.func @transform_1(%arg0: i32, %arg1: i32) -> (i32, i32) {
    %c0_i32 = arith.constant 0 : i32
    %c0_i32_0 = arith.constant 0 : i32
    %c0_i32_1 = arith.constant 0 : i32
    return %c0_i32, %c0_i32_0 : i32, i32
  }
  func.func @transform_2(%arg0: i32, %arg1: i32) -> (i32, i32) {
    %c0_i32 = arith.constant 0 : i32
    %c0_i32_0 = arith.constant 0 : i32
    %c0_i32_1 = arith.constant 0 : i32
    return %c0_i32, %c0_i32_0 : i32, i32
  }
  func.func @transform_3(%arg0: i32, %arg1: i32) -> (i32, i32) {
    %c0_i32 = arith.constant 0 : i32
    %c0_i32_0 = arith.constant 0 : i32
    %c0_i32_1 = arith.constant 0 : i32
    return %c0_i32, %c0_i32_0 : i32, i32
  }
  func.func @transform_4(%arg0: i32, %arg1: i32) -> (i32, i32) {
    %c0_i32 = arith.constant 0 : i32
    %c0_i32_0 = arith.constant 0 : i32
    %c0_i32_1 = arith.constant 0 : i32
    return %c0_i32, %c0_i32_0 : i32, i32
  }
  func.func @transform_5(%arg0: i32, %arg1: i32) -> (i32, i32) {
    %c0_i32 = arith.constant 0 : i32
    %c0_i32_0 = arith.constant 0 : i32
    return %arg0, %c0_i32 : i32, i32
  }
}

</mosaic_0001>

<llo_original>
// kernel: tpu_custom_call.1
$region0: #{tpu_custom_call.1}
  #allocation0 [shape = 'u32[]', space=smem, size = 0x4, offset = 0x4, fixed_abs, tag = 'smem constant byte address 0x4 - core index']
  #allocation1 [shape = 'u32[144,128]{1,0:T(1,128)}', space=vmem, size = 0x12000, scoped, tag = 'internal scratch']
  #allocation2 [shape = 'f32[8,32]{1,0:T(8,128)}', space=vmem, size = 0x1000, scoped, tag = 'scratch operand']
  %s0 = inlined_call_operand.hbm [shape: f32[2,8,32], index: 0, kind: input, shape index: {}]
  %s1 = inlined_call_operand.hbm [shape: f32[32,128], index: 1, kind: input, shape index: {}]
  %s2 = inlined_call_operand.vmem [shape: f32[1,128], index: 2, kind: input, shape index: {}]
  %s3 = inlined_call_operand.hbm [shape: f32[128,128], index: 3, kind: input, shape index: {}]
  %s4 = inlined_call_operand.vmem [shape: f32[1,128], index: 4, kind: input, shape index: {}]
  %s5 = inlined_call_operand.hbm [shape: f32[2,128], index: 5, kind: output, shape index: {}]
  %s6 = sld [smem:[#allocation0]]
  $region50: #{tpu_custom_call.1} parent=0
    _
  %s8 = ssub.s32 1, %s6
  %s9 = scalar_select 0, %s8, %s6
  $region1: #{tpu_custom_call.1} parent=0
    #allocation3 [shape = 'u8[32768]{0}', space=vmem, size = 0x8000, scoped, tag = 'input window, operand 0, single buffered']
    #allocation4 [shape = 's32[1]{0}', space=sflag, size = 0x4, scoped, tag = 'scoped memory for tpu_custom_call.1']
    #allocation5 [shape = 's32[1]{0}', space=sflag, size = 0x4, scoped, tag = 'scoped memory for tpu_custom_call.1']
    #allocation6 [shape = 'u8[16384]{0}', space=vmem, size = 0x4000, scoped, tag = 'input window, operand 1, single buffered']
    #allocation7 [shape = 's32[1]{0}', space=sflag, size = 0x4, scoped, tag = 'scoped memory for tpu_custom_call.1']
    #allocation8 [shape = 'u8[65536]{0}', space=vmem, size = 0x10000, scoped, tag = 'input window, operand 3, single buffered']
    #allocation9 [shape = 'u8[4096]{0}', space=vmem, size = 0x1000, scoped, tag = 'output window, operand 0, single buffered']
    %10 = vsyncpa [#allocation4], 0
    %11 = vsyncpa [#allocation7], 0
    %12 = vsyncpa [#allocation5], 0
    // Predicated region
    $region2: #{tpu_custom_call.1} parent=1 // pred_check
      _
    $region3: #{tpu_custom_call.1} parent=1 // pred_check_branch
      %14 = sbr.rel (0) target = $region5
    $region4: #{tpu_custom_call.1} parent=1 // pred_region
      %s16 = ssub.s32 1024, 256
      %17 = vsyncadd [#allocation4], %s16
      %s18 = sshll.u32 [#allocation3], 4
      %s19 = int_to_ptr.vmem [resolvable:$true] %s18
      %24 = dma.hbm_to_vmem [thread:$0]  %s0, 256, %s19, [#allocation4], 128, 128, 8
    $region5: #{tpu_custom_call.1} parent=1 // pred_fallthru
      _
    // Predicated region
    $region6: #{tpu_custom_call.1} parent=1 // pred_check
      _
    $region7: #{tpu_custom_call.1} parent=1 // pred_check_branch
      %26 = sbr.rel (0) target = $region9
    $region8: #{tpu_custom_call.1} parent=1 // pred_region
      %s28 = ssub.s32 512, 512
      %29 = vsyncadd [#allocation7], %s28
      %s30 = sshll.u32 [#allocation6], 4
      %s31 = int_to_ptr.vmem [resolvable:$true] %s30
      %36 = dma.hbm_to_vmem [thread:$0]  %s1, 512, %s31, [#allocation7], 128, 128, 8
    $region9: #{tpu_custom_call.1} parent=1 // pred_fallthru
      _
    // Predicated region
    $region10: #{tpu_custom_call.1} parent=1 // pred_check
      _
    $region11: #{tpu_custom_call.1} parent=1 // pred_check_branch
      %38 = sbr.rel (0) target = $region13
    $region12: #{tpu_custom_call.1} parent=1 // pred_region
      _
    $region13: #{tpu_custom_call.1} parent=1 // pred_fallthru
      _
    // Predicated region
    $region14: #{tpu_custom_call.1} parent=1 // pred_check
      _
    $region15: #{tpu_custom_call.1} parent=1 // pred_check_branch
      %40 = sbr.rel (0) target = $region17
    $region16: #{tpu_custom_call.1} parent=1 // pred_region
      %s42 = ssub.s32 2048, 2048
      %43 = vsyncadd [#allocation7], %s42
      %s44 = sshll.u32 [#allocation8], 4
      %s45 = int_to_ptr.vmem [resolvable:$true] %s44
      %50 = dma.hbm_to_vmem [thread:$0]  %s3, 2048, %s45, [#allocation7], 128, 128, 8
    $region17: #{tpu_custom_call.1} parent=1 // pred_fallthru
      _
    // Predicated region
    $region18: #{tpu_custom_call.1} parent=1 // pred_check
      _
    $region19: #{tpu_custom_call.1} parent=1 // pred_check_branch
      %52 = sbr.rel (0) target = $region21
    $region20: #{tpu_custom_call.1} parent=1 // pred_region
      _
    $region21: #{tpu_custom_call.1} parent=1 // pred_fallthru
      _
    // Predicated region
    $region22: #{tpu_custom_call.1} parent=1 // pred_check
      _
    $region23: #{tpu_custom_call.1} parent=1 // pred_check_branch
      %54 = sbr.rel (0) target = $region25
    $region24: #{tpu_custom_call.1} parent=1 // pred_region
      %55 = dma.done [#allocation4], 1024
    $region25: #{tpu_custom_call.1} parent=1 // pred_fallthru
      _
    // Predicated region
    $region26: #{tpu_custom_call.1} parent=1 // pred_check
      _
    $region27: #{tpu_custom_call.1} parent=1 // pred_check_branch
      %57 = sbr.rel (0) target = $region29
    $region28: #{tpu_custom_call.1} parent=1 // pred_region
      %58 = dma.done [#allocation7], 512
    $region29: #{tpu_custom_call.1} parent=1 // pred_fallthru
      _
    // Predicated region
    $region30: #{tpu_custom_call.1} parent=1 // pred_check
      _
    $region31: #{tpu_custom_call.1} parent=1 // pred_check_branch
      %60 = sbr.rel (0) target = $region33
    $region32: #{tpu_custom_call.1} parent=1 // pred_region
      %61 = dma.done [#allocation7], 2048
    $region33: #{tpu_custom_call.1} parent=1 // pred_fallthru
      _
    %p62 = scmp.eq.s32.totalorder 0, 0
    // Predicated region
    $region34: #{tpu_custom_call.1} parent=1 // pred_check
      %p63 = pneg %p62
    $region35: #{tpu_custom_call.1} parent=1 // pred_check_branch
      %65 = sbr.rel (%p63) target = $region37
    $region36: #{tpu_custom_call.1} parent=1 // pred_region
      %vm66 = vcmask 261120
      %67 = vst.msk [vmem:[#allocation2] sm:$0xff] %vm66, 0.0
    $region37: #{tpu_custom_call.1} parent=1 // pred_fallthru
      _
    %v68 = vld [vmem:[#allocation3] sm:$0xff]
    %v69 = vld [vmem:[#allocation3 + $0x8] sm:$0xff]
    %v70 = vld [vmem:[#allocation3 + $0x10] sm:$0xff]
    %v71 = vld [vmem:[#allocation3 + $0x18] sm:$0xff]
    %v72 = vld [vmem:[#allocation3 + $0x20] sm:$0xff]
    %v73 = vld [vmem:[#allocation3 + $0x28] sm:$0xff]
    %v74 = vld [vmem:[#allocation3 + $0x30] sm:$0xff]
    %v75 = vld [vmem:[#allocation3 + $0x38] sm:$0xff]
    %v76 = vld [vmem:[#allocation2] sm:$0xff]
    %vm77 = vcmask 261120
    %v78 = vsel %vm77, %v68, 0.0
    %v79 = vrot.slane %v78, 4
    %v80 = vadd.f32 %v78, %v79
    %v81 = vrot.slane %v80, 2
    %v82 = vadd.f32 %v80, %v81
    %v83 = vrot.slane %v82, 1
    %v84 = vadd.f32 %v82, %v83
    %v85 = vsel %vm77, %v69, 0.0
    %v86 = vrot.slane %v85, 4
    %v87 = vadd.f32 %v85, %v86
    %v88 = vrot.slane %v87, 2
    %v89 = vadd.f32 %v87, %v88
    %v90 = vrot.slane %v89, 1
    %v91 = vadd.f32 %v89, %v90
    %v92 = vsel %vm77, %v70, 0.0
    %v93 = vrot.slane %v92, 4
    %v94 = vadd.f32 %v92, %v93
    %v95 = vrot.slane %v94, 2
    %v96 = vadd.f32 %v94, %v95
    %v97 = vrot.slane %v96, 1
    %v98 = vadd.f32 %v96, %v97
    %v99 = vsel %vm77, %v71, 0.0
    %v100 = vrot.slane %v99, 4
    %v101 = vadd.f32 %v99, %v100
    %v102 = vrot.slane %v101, 2
    %v103 = vadd.f32 %v101, %v102
    %v104 = vrot.slane %v103, 1
    %v105 = vadd.f32 %v103, %v104
    %v106 = vsel %vm77, %v72, 0.0
    %v107 = vrot.slane %v106, 4
    %v108 = vadd.f32 %v106, %v107
    %v109 = vrot.slane %v108, 2
    %v110 = vadd.f32 %v108, %v109
    %v111 = vrot.slane %v110, 1
    %v112 = vadd.f32 %v110, %v111
    %v113 = vsel %vm77, %v73, 0.0
    %v114 = vrot.slane %v113, 4
    %v115 = vadd.f32 %v113, %v114
    %v116 = vrot.slane %v115, 2
    %v117 = vadd.f32 %v115, %v116
    %v118 = vrot.slane %v117, 1
    %v119 = vadd.f32 %v117, %v118
    %v120 = vsel %vm77, %v74, 0.0
    %v121 = vrot.slane %v120, 4
    %v122 = vadd.f32 %v120, %v121
    %v123 = vrot.slane %v122, 2
    %v124 = vadd.f32 %v122, %v123
    %v125 = vrot.slane %v124, 1
    %v126 = vadd.f32 %v124, %v125
    %v127 = vsel %vm77, %v75, 0.0
    %v128 = vrot.slane %v127, 4
    %v129 = vadd.f32 %v127, %v128
    %v130 = vrot.slane %v129, 2
    %v131 = vadd.f32 %v129, %v130
    %v132 = vrot.slane %v131, 1
    %v133 = vadd.f32 %v131, %v132
    %vm142 = vcmask 1041409
    %v143 = vsel %vm142, %v91, %v84
    %vm144 = vcmask 1042434
    %v145 = vsel %vm144, %v98, %v143
    %vm146 = vcmask 1043459
    %v147 = vsel %vm146, %v105, %v145
    %vm148 = vcmask 1044484
    %v149 = vsel %vm148, %v112, %v147
    %vm150 = vcmask 1045509
    %v151 = vsel %vm150, %v119, %v149
    %vm152 = vcmask 1046534
    %v153 = vsel %vm152, %v126, %v151
    %vm154 = vcmask 1047559
    %v155 = vsel %vm154, %v133, %v153
    %v157 = vadd.f32 %v76, %v155
    %158 = vst.msk [vmem:[#allocation2] sm:$0xff] %vm77, %v157
    // Predicated region
    $region38: #{tpu_custom_call.1} parent=1 // pred_check
      %p159 = pneg %p62
    $region39: #{tpu_custom_call.1} parent=1 // pred_check_branch
      %161 = sbr.rel (%p159) target = $region41
    $region40: #{tpu_custom_call.1} parent=1 // pred_region
      %v162 = vld [vmem:[#allocation2] sm:$0xff]
      %v163 = vmul.f32 %v162, 0.125
      %v164 = vld [vmem:[#allocation6] sm:$0xff]
      %v165 = vld [vmem:[#allocation6 + $0x8] sm:$0xff]
      %v166 = vld [vmem:[#allocation6 + $0x10] sm:$0xff]
      %v167 = vld [vmem:[#allocation6 + $0x18] sm:$0xff]
      %v168 = vld [vmem:[%s2] sm:$0x1]
      %v170 = vlaneseq
      %v171 = vshrl.u32 %v170, 7
      %v172 = vsub.s32 0, %v171
      %v173 = vrot.slane %v168, %v172
      %v176 = vsel %vm77, %v163, 0
      %178 = vmatprep.subr.mxu0 0.0
      %179 = vmatpush1.msra.mxu0 %v164
      %180 = vmatprep.subr.mxu0 0.0
      %181 = vmatpush1.msra.mxu0 %v165
      %182 = vmatprep.subr.mxu0 0.0
      %183 = vmatpush1.msra.mxu0 %v166
      %184 = vmatprep.subr.mxu0 0.0
      %185 = vmatpush1.msra.mxu0 %v167
      %186 = vmatprep.subr.mxu0 0.0
      %187 = vmatpush1.msra.mxu0 0.0
      %188 = vmatprep.subr.mxu0 0.0
      %189 = vmatpush1.msra.mxu0 0.0
      %190 = vmatprep.subr.mxu0 0.0
      %191 = vmatpush1.msra.mxu0 0.0
      %192 = vmatprep.subr.mxu0 0.0
      %193 = vmatpush1.msra.mxu0 0.0
      %194 = vmatprep.subr.mxu0 0.0
      %195 = vmatpush1.msra.mxu0 0.0
      %196 = vmatprep.subr.mxu0 0.0
      %197 = vmatpush1.msra.mxu0 0.0
      %198 = vmatprep.subr.mxu0 0.0
      %199 = vmatpush1.msra.mxu0 0.0
      %200 = vmatprep.subr.mxu0 0.0
      %201 = vmatpush1.msra.mxu0 0.0
      %202 = vmatprep.subr.mxu0 0.0
      %203 = vmatpush1.msra.mxu0 0.0
      %204 = vmatprep.subr.mxu0 0.0
      %205 = vmatpush1.msra.mxu0 0.0
      %206 = vmatprep.subr.mxu0 0.0
      %207 = vmatpush1.msra.mxu0 0.0
      %208 = vmatprep.subr.mxu0 0.0
      %209 = vmatpush1.msra.mxu0 0.0
      %210 = vmatprep.subr.mxu0 0.0
      %211 = vmatpush1.msra.mxu0 0.0
      %212 = vmatprep.subr.mxu0 0.0
      %213 = vmatpush1.msra.mxu0 0.0
      %214 = vmatprep.subr.mxu0 0.0
      %215 = vmatpush1.msra.mxu0 0.0
      %216 = vmatprep.subr.mxu0 0.0
      %217 = vmatpush1.msra.mxu0 0.0
      %218 = vmatprep.subr.mxu0 0.0
      %219 = vmatpush1.msra.mxu0 0.0
      %220 = vmatprep.subr.mxu0 0.0
      %221 = vmatpush1.msra.mxu0 0.0
      %222 = vmatprep.subr.mxu0 0.0
      %223 = vmatpush1.msra.mxu0 0.0
      %224 = vmatprep.subr.mxu0 0.0
      %225 = vmatpush1.msra.mxu0 0.0
      %226 = vmatprep.subr.mxu0 0.0
      %227 = vmatpush1.msra.mxu0 0.0
      %228 = vmatprep.subr.mxu0 0.0
      %229 = vmatpush1.msra.mxu0 0.0
      %230 = vmatprep.subr.mxu0 0.0
      %231 = vmatpush1.msra.mxu0 0.0
      %232 = vmatprep.subr.mxu0 0.0
      %233 = vmatpush1.msra.mxu0 0.0
      %234 = vmatprep.subr.mxu0 0.0
      %235 = vmatpush1.msra.mxu0 0.0
      %236 = vmatprep.subr.mxu0 0.0
      %237 = vmatpush1.msra.mxu0 0.0
      %238 = vmatprep.subr.mxu0 0.0
      %239 = vmatpush1.msra.mxu0 0.0
      %240 = vmatprep.subr.mxu0 0.0
      %241 = vmatpush1.msra.mxu0 0.0
      %242 = vmatprep.mubr.f32.mxu0 0.0
      %243 = vmatmul.mubr.f32.gmra.mrb[0].mxu0 %v176
      %v244 = vpop.f32.mrb[0].mxu0
      %v245 = vadd.f32 %v173, %v244
      %v246 = vpop.f32.mrb[0].mxu0
      %247 = vdwg.mxu0
      %v248 = vtanh.pop %v245
      %v249 = vld [vmem:[#allocation8] sm:$0xff]
      %v250 = vld [vmem:[#allocation8 + $0x8] sm:$0xff]
      %v251 = vld [vmem:[#allocation8 + $0x10] sm:$0xff]
      %v252 = vld [vmem:[#allocation8 + $0x18] sm:$0xff]
      %v253 = vld [vmem:[#allocation8 + $0x20] sm:$0xff]
      %v254 = vld [vmem:[#allocation8 + $0x28] sm:$0xff]
      %v255 = vld [vmem:[#allocation8 + $0x30] sm:$0xff]
      %v256 = vld [vmem:[#allocation8 + $0x38] sm:$0xff]
      %v257 = vld [vmem:[#allocation8 + $0x40] sm:$0xff]
      %v258 = vld [vmem:[#allocation8 + $0x48] sm:$0xff]
      %v259 = vld [vmem:[#allocation8 + $0x50] sm:$0xff]
      %v260 = vld [vmem:[#allocation8 + $0x58] sm:$0xff]
      %v261 = vld [vmem:[#allocation8 + $0x60] sm:$0xff]
      %v262 = vld [vmem:[#allocation8 + $0x68] sm:$0xff]
      %v263 = vld [vmem:[#allocation8 + $0x70] sm:$0xff]
      %v264 = vld [vmem:[#allocation8 + $0x78] sm:$0xff]
      %v265 = vld [vmem:[%s4] sm:$0x1]
      %v267 = vlaneseq
      %v268 = vshrl.u32 %v267, 7
      %v269 = vsub.s32 0, %v268
      %v270 = vrot.slane %v265, %v269
      %272 = vmatprep.subr.mxu0 0.0
      %273 = vmatpush1.msra.mxu0 %v249
      %274 = vmatprep.subr.mxu0 0.0
      %275 = vmatpush1.msra.mxu0 %v250
      %276 = vmatprep.subr.mxu0 0.0
      %277 = vmatpush1.msra.mxu0 %v251
      %278 = vmatprep.subr.mxu0 0.0
      %279 = vmatpush1.msra.mxu0 %v252
      %280 = vmatprep.subr.mxu0 0.0
      %281 = vmatpush1.msra.mxu0 %v253
      %282 = vmatprep.subr.mxu0 0.0
      %283 = vmatpush1.msra.mxu0 %v254
      %284 = vmatprep.subr.mxu0 0.0
      %285 = vmatpush1.msra.mxu0 %v255
      %286 = vmatprep.subr.mxu0 0.0
      %287 = vmatpush1.msra.mxu0 %v256
      %288 = vmatprep.subr.mxu0 0.0
      %289 = vmatpush1.msra.mxu0 %v257
      %290 = vmatprep.subr.mxu0 0.0
      %291 = vmatpush1.msra.mxu0 %v258
      %292 = vmatprep.subr.mxu0 0.0
      %293 = vmatpush1.msra.mxu0 %v259
      %294 = vmatprep.subr.mxu0 0.0
      %295 = vmatpush1.msra.mxu0 %v260
      %296 = vmatprep.subr.mxu0 0.0
      %297 = vmatpush1.msra.mxu0 %v261
      %298 = vmatprep.subr.mxu0 0.0
      %299 = vmatpush1.msra.mxu0 %v262
      %300 = vmatprep.subr.mxu0 0.0
      %301 = vmatpush1.msra.mxu0 %v263
      %302 = vmatprep.subr.mxu0 0.0
      %303 = vmatpush1.msra.mxu0 %v264
      %304 = vmatprep.subr.mxu0 0.0
      %305 = vmatpush1.msra.mxu0 0.0
      %306 = vmatprep.subr.mxu0 0.0
      %307 = vmatpush1.msra.mxu0 0.0
      %308 = vmatprep.subr.mxu0 0.0
      %309 = vmatpush1.msra.mxu0 0.0
      %310 = vmatprep.subr.mxu0 0.0
      %311 = vmatpush1.msra.mxu0 0.0
      %312 = vmatprep.subr.mxu0 0.0
      %313 = vmatpush1.msra.mxu0 0.0
      %314 = vmatprep.subr.mxu0 0.0
      %315 = vmatpush1.msra.mxu0 0.0
      %316 = vmatprep.subr.mxu0 0.0
      %317 = vmatpush1.msra.mxu0 0.0
      %318 = vmatprep.subr.mxu0 0.0
      %319 = vmatpush1.msra.mxu0 0.0
      %320 = vmatprep.subr.mxu0 0.0
      %321 = vmatpush1.msra.mxu0 0.0
      %322 = vmatprep.subr.mxu0 0.0
      %323 = vmatpush1.msra.mxu0 0.0
      %324 = vmatprep.subr.mxu0 0.0
      %325 = vmatpush1.msra.mxu0 0.0
      %326 = vmatprep.subr.mxu0 0.0
      %327 = vmatpush1.msra.mxu0 0.0
      %328 = vmatprep.subr.mxu0 0.0
      %329 = vmatpush1.msra.mxu0 0.0
      %330 = vmatprep.subr.mxu0 0.0
      %331 = vmatpush1.msra.mxu0 0.0
      %332 = vmatprep.subr.mxu0 0.0
      %333 = vmatpush1.msra.mxu0 0.0
      %334 = vmatprep.subr.mxu0 0.0
      %335 = vmatpush1.msra.mxu0 0.0
      %336 = vmatprep.mubr.f32.mxu0 0.0
      %337 = vmatmul.mubr.f32.gmra.mrb[0].mxu0 %v248
      %v338 = vpop.f32.mrb[0].mxu0
      %v339 = vadd.f32 %v270, %v338
      %v340 = vpop.f32.mrb[0].mxu0
      %341 = vdwg.mxu0
      %342 = vst [vmem:[#allocation9] sm:$0xff] %v339
    $region41: #{tpu_custom_call.1} parent=1 // pred_fallthru
      _
    // Predicated region
    $region42: #{tpu_custom_call.1} parent=1 // pred_check
      _
    $region43: #{tpu_custom_call.1} parent=1 // pred_check_branch
      %344 = sbr.rel (0) target = $region45
    $region44: #{tpu_custom_call.1} parent=1 // pred_region
      %s346 = ssub.s32 128, 32
      %347 = vsyncadd [#allocation5], %s346
      %s348 = sshll.u32 [#allocation9], 4
      %s349 = int_to_ptr.vmem [resolvable:$true] %s348
      %354 = dma.vmem_to_hbm [thread:$0]  %s349, 32, %s5, [#allocation5], 32, 32, 2
    $region45: #{tpu_custom_call.1} parent=1 // pred_fallthru
      _
    // Predicated region
    $region46: #{tpu_custom_call.1} parent=1 // pred_check
      _
    $region47: #{tpu_custom_call.1} parent=1 // pred_check_branch
      %356 = sbr.rel (0) target = $region49
    $region48: #{tpu_custom_call.1} parent=1 // pred_region
      %357 = dma.done [#allocation5], 128
    $region49: #{tpu_custom_call.1} parent=1 // pred_fallthru
      _
    %358 = vsyncpa [#allocation4], 1
    %359 = vsyncpa [#allocation7], 1
    %360 = vsyncpa [#allocation5], 1

// kernel: tpu_custom_call.1
$region0: #{tpu_custom_call.1}
  #allocation0 [shape = 'u32[]', space=smem, size = 0x4, offset = 0x4, fixed_abs, tag = 'smem constant byte address 0x4 - core index']
  #allocation1 [shape = 'u32[144,128]{1,0:T(1,128)}', space=vmem, size = 0x12000, scoped, tag = 'internal scratch']
  #allocation2 [shape = 'f32[8,32]{1,0:T(8,128)}', space=vmem, size = 0x1000, scoped, tag = 'scratch operand']
  %s0 = inlined_call_operand.hbm [shape: f32[2,8,32], index: 0, kind: input, shape index: {}]
  %s1 = inlined_call_operand.hbm [shape: f32[32,128], index: 1, kind: input, shape index: {}]
  %s2 = inlined_call_operand.vmem [shape: f32[1,128], index: 2, kind: input, shape index: {}]
  %s3 = inlined_call_operand.hbm [shape: f32[128,128], index: 3, kind: input, shape index: {}]
  %s4 = inlined_call_operand.vmem [shape: f32[1,128], index: 4, kind: input, shape index: {}]
  %s5 = inlined_call_operand.hbm [shape: f32[2,128], index: 5, kind: output, shape index: {}]
  %s6 = sld [smem:[#allocation0]]
  $region50: #{tpu_custom_call.1} parent=0
    _
  %s8 = ssub.s32 1, %s6
  %s9 = scalar_select 0, %s8, %s6
  $region1: #{tpu_custom_call.1} parent=0
    #allocation3 [shape = 'u8[32768]{0}', space=vmem, size = 0x8000, scoped, tag = 'input window, operand 0, single buffered']
    #allocation4 [shape = 's32[1]{0}', space=sflag, size = 0x4, scoped, tag = 'scoped memory for tpu_custom_call.1']
    #allocation5 [shape = 's32[1]{0}', space=sflag, size = 0x4, scoped, tag = 'scoped memory for tpu_custom_call.1']
    #allocation6 [shape = 'u8[16384]{0}', space=vmem, size = 0x4000, scoped, tag = 'input window, operand 1, single buffered']
    #allocation7 [shape = 's32[1]{0}', space=sflag, size = 0x4, scoped, tag = 'scoped memory for tpu_custom_call.1']
    #allocation8 [shape = 'u8[65536]{0}', space=vmem, size = 0x10000, scoped, tag = 'input window, operand 3, single buffered']
    #allocation9 [shape = 'u8[4096]{0}', space=vmem, size = 0x1000, scoped, tag = 'output window, operand 0, single buffered']
    %10 = vsyncpa [#allocation4], 0
    %11 = vsyncpa [#allocation7], 0
    %12 = vsyncpa [#allocation5], 0
    // Predicated region
    $region2: #{tpu_custom_call.1} parent=1 // pred_check
      _
    $region3: #{tpu_custom_call.1} parent=1 // pred_check_branch
      %14 = sbr.rel (0) target = $region5
    $region4: #{tpu_custom_call.1} parent=1 // pred_region
      %s16 = ssub.s32 1024, 256
      %17 = vsyncadd [#allocation4], %s16
      %s18 = sshll.u32 [#allocation3], 4
      %s19 = int_to_ptr.vmem [resolvable:$true] %s18
      %24 = dma.hbm_to_vmem [thread:$0]  %s0, 256, %s19, [#allocation4], 128, 128, 8
    $region5: #{tpu_custom_call.1} parent=1 // pred_fallthru
      _
    // Predicated region
    $region6: #{tpu_custom_call.1} parent=1 // pred_check
      _
    $region7: #{tpu_custom_call.1} parent=1 // pred_check_branch
      %26 = sbr.rel (0) target = $region9
    $region8: #{tpu_custom_call.1} parent=1 // pred_region
      %s28 = ssub.s32 512, 512
      %29 = vsyncadd [#allocation7], %s28
      %s30 = sshll.u32 [#allocation6], 4
      %s31 = int_to_ptr.vmem [resolvable:$true] %s30
      %36 = dma.hbm_to_vmem [thread:$0]  %s1, 512, %s31, [#allocation7], 128, 128, 8
    $region9: #{tpu_custom_call.1} parent=1 // pred_fallthru
      _
    // Predicated region
    $region10: #{tpu_custom_call.1} parent=1 // pred_check
      _
    $region11: #{tpu_custom_call.1} parent=1 // pred_check_branch
      %38 = sbr.rel (0) target = $region13
    $region12: #{tpu_custom_call.1} parent=1 // pred_region
      _
    $region13: #{tpu_custom_call.1} parent=1 // pred_fallthru
      _
    // Predicated region
    $region14: #{tpu_custom_call.1} parent=1 // pred_check
      _
    $region15: #{tpu_custom_call.1} parent=1 // pred_check_branch
      %40 = sbr.rel (0) target = $region17
    $region16: #{tpu_custom_call.1} parent=1 // pred_region
      %s42 = ssub.s32 2048, 2048
      %43 = vsyncadd [#allocation7], %s42
      %s44 = sshll.u32 [#allocation8], 4
      %s45 = int_to_ptr.vmem [resolvable:$true] %s44
      %50 = dma.hbm_to_vmem [thread:$0]  %s3, 2048, %s45, [#allocation7], 128, 128, 8
    $region17: #{tpu_custom_call.1} parent=1 // pred_fallthru
      _
    // Predicated region
    $region18: #{tpu_custom_call.1} parent=1 // pred_check
      _
    $region19: #{tpu_custom_call.1} parent=1 // pred_check_branch
      %52 = sbr.rel (0) target = $region21
    $region20: #{tpu_custom_call.1} parent=1 // pred_region
      _
    $region21: #{tpu_custom_call.1} parent=1 // pred_fallthru
      _
    // Predicated region
    $region22: #{tpu_custom_call.1} parent=1 // pred_check
      _
    $region23: #{tpu_custom_call.1} parent=1 // pred_check_branch
      %54 = sbr.rel (0) target = $region25
    $region24: #{tpu_custom_call.1} parent=1 // pred_region
      %55 = dma.done [#allocation4], 1024
    $region25: #{tpu_custom_call.1} parent=1 // pred_fallthru
      _
    // Predicated region
    $region26: #{tpu_custom_call.1} parent=1 // pred_check
      _
    $region27: #{tpu_custom_call.1} parent=1 // pred_check_branch
      %57 = sbr.rel (0) target = $region29
    $region28: #{tpu_custom_call.1} parent=1 // pred_region
      %58 = dma.done [#allocation7], 512
    $region29: #{tpu_custom_call.1} parent=1 // pred_fallthru
      _
    // Predicated region
    $region30: #{tpu_custom_call.1} parent=1 // pred_check
      _
    $region31: #{tpu_custom_call.1} parent=1 // pred_check_branch
      %60 = sbr.rel (0) target = $region33
    $region32: #{tpu_custom_call.1} parent=1 // pred_region
      %61 = dma.done [#allocation7], 2048
    $region33: #{tpu_custom_call.1} parent=1 // pred_fallthru
      _
    %p62 = scmp.eq.s32.totalorder 0, 0
    // Predicated region
    $region34: #{tpu_custom_call.1} parent=1 // pred_check
      %p63 = pneg %p62
    $region35: #{tpu_custom_call.1} parent=1 // pred_check_branch
      %65 = sbr.rel (%p63) target = $region37
    $region36: #{tpu_custom_call.1} parent=1 // pred_region
      %vm66 = vcmask 261120
      %67 = vst.msk [vmem:[#allocation2] sm:$0xff] %vm66, 0.0
    $region37: #{tpu_custom_call.1} parent=1 // pred_fallthru
      _
    %v68 = vld [vmem:[#allocation3] sm:$0xff]
    %v69 = vld [vmem:[#allocation3 + $0x8] sm:$0xff]
    %v70 = vld [vmem:[#allocation3 + $0x10] sm:$0xff]
    %v71 = vld [vmem:[#allocation3 + $0x18] sm:$0xff]
    %v72 = vld [vmem:[#allocation3 + $0x20] sm:$0xff]
    %v73 = vld [vmem:[#allocation3 + $0x28] sm:$0xff]
    %v74 = vld [vmem:[#allocation3 + $0x30] sm:$0xff]
    %v75 = vld [vmem:[#allocation3 + $0x38] sm:$0xff]
    %v76 = vld [vmem:[#allocation2] sm:$0xff]
    %vm77 = vcmask 261120
    %v78 = vsel %vm77, %v68, 0.0
    %v79 = vrot.slane %v78, 4
    %v80 = vadd.f32 %v78, %v79
    %v81 = vrot.slane %v80, 2
    %v82 = vadd.f32 %v80, %v81
    %v83 = vrot.slane %v82, 1
    %v84 = vadd.f32 %v82, %v83
    %v85 = vsel %vm77, %v69, 0.0
    %v86 = vrot.slane %v85, 4
    %v87 = vadd.f32 %v85, %v86
    %v88 = vrot.slane %v87, 2
    %v89 = vadd.f32 %v87, %v88
    %v90 = vrot.slane %v89, 1
    %v91 = vadd.f32 %v89, %v90
    %v92 = vsel %vm77, %v70, 0.0
    %v93 = vrot.slane %v92, 4
    %v94 = vadd.f32 %v92, %v93
    %v95 = vrot.slane %v94, 2
    %v96 = vadd.f32 %v94, %v95
    %v97 = vrot.slane %v96, 1
    %v98 = vadd.f32 %v96, %v97
    %v99 = vsel %vm77, %v71, 0.0
    %v100 = vrot.slane %v99, 4
    %v101 = vadd.f32 %v99, %v100
    %v102 = vrot.slane %v101, 2
    %v103 = vadd.f32 %v101, %v102
    %v104 = vrot.slane %v103, 1
    %v105 = vadd.f32 %v103, %v104
    %v106 = vsel %vm77, %v72, 0.0
    %v107 = vrot.slane %v106, 4
    %v108 = vadd.f32 %v106, %v107
    %v109 = vrot.slane %v108, 2
    %v110 = vadd.f32 %v108, %v109
    %v111 = vrot.slane %v110, 1
    %v112 = vadd.f32 %v110, %v111
    %v113 = vsel %vm77, %v73, 0.0
    %v114 = vrot.slane %v113, 4
    %v115 = vadd.f32 %v113, %v114
    %v116 = vrot.slane %v115, 2
    %v117 = vadd.f32 %v115, %v116
    %v118 = vrot.slane %v117, 1
    %v119 = vadd.f32 %v117, %v118
    %v120 = vsel %vm77, %v74, 0.0
    %v121 = vrot.slane %v120, 4
    %v122 = vadd.f32 %v120, %v121
    %v123 = vrot.slane %v122, 2
    %v124 = vadd.f32 %v122, %v123
    %v125 = vrot.slane %v124, 1
    %v126 = vadd.f32 %v124, %v125
    %v127 = vsel %vm77, %v75, 0.0
    %v128 = vrot.slane %v127, 4
    %v129 = vadd.f32 %v127, %v128
    %v130 = vrot.slane %v129, 2
    %v131 = vadd.f32 %v129, %v130
    %v132 = vrot.slane %v131, 1
    %v133 = vadd.f32 %v131, %v132
    %vm142 = vcmask 1041409
    %v143 = vsel %vm142, %v91, %v84
    %vm144 = vcmask 1042434
    %v145 = vsel %vm144, %v98, %v143
    %vm146 = vcmask 1043459
    %v147 = vsel %vm146, %v105, %v145
    %vm148 = vcmask 1044484
    %v149 = vsel %vm148, %v112, %v147
    %vm150 = vcmask 1045509
    %v151 = vsel %vm150, %v119, %v149
    %vm152 = vcmask 1046534
    %v153 = vsel %vm152, %v126, %v151
    %vm154 = vcmask 1047559
    %v155 = vsel %vm154, %v133, %v153
    %v157 = vadd.f32 %v76, %v155
    %158 = vst.msk [vmem:[#allocation2] sm:$0xff] %vm77, %v157
    // Predicated region
    $region38: #{tpu_custom_call.1} parent=1 // pred_check
      %p159 = pneg %p62
    $region39: #{tpu_custom_call.1} parent=1 // pred_check_branch
      %161 = sbr.rel (%p159) target = $region41
    $region40: #{tpu_custom_call.1} parent=1 // pred_region
      %v162 = vld [vmem:[#allocation2] sm:$0xff]
      %v163 = vmul.f32 %v162, 0.125
      %v164 = vld [vmem:[#allocation6] sm:$0xff]
      %v165 = vld [vmem:[#allocation6 + $0x8] sm:$0xff]
      %v166 = vld [vmem:[#allocation6 + $0x10] sm:$0xff]
      %v167 = vld [vmem:[#allocation6 + $0x18] sm:$0xff]
      %v168 = vld [vmem:[%s2] sm:$0x1]
      %v170 = vlaneseq
      %v171 = vshrl.u32 %v170, 7
      %v172 = vsub.s32 0, %v171
      %v173 = vrot.slane %v168, %v172
      %v176 = vsel %vm77, %v163, 0
      %178 = vmatprep.subr.mxu0 0.0
      %179 = vmatpush1.msra.mxu0 %v164
      %180 = vmatprep.subr.mxu0 0.0
      %181 = vmatpush1.msra.mxu0 %v165
      %182 = vmatprep.subr.mxu0 0.0
      %183 = vmatpush1.msra.mxu0 %v166
      %184 = vmatprep.subr.mxu0 0.0
      %185 = vmatpush1.msra.mxu0 %v167
      %186 = vmatprep.subr.mxu0 0.0
      %187 = vmatpush1.msra.mxu0 0.0
      %188 = vmatprep.subr.mxu0 0.0
      %189 = vmatpush1.msra.mxu0 0.0
      %190 = vmatprep.subr.mxu0 0.0
      %191 = vmatpush1.msra.mxu0 0.0
      %192 = vmatprep.subr.mxu0 0.0
      %193 = vmatpush1.msra.mxu0 0.0
      %194 = vmatprep.subr.mxu0 0.0
      %195 = vmatpush1.msra.mxu0 0.0
      %196 = vmatprep.subr.mxu0 0.0
      %197 = vmatpush1.msra.mxu0 0.0
      %198 = vmatprep.subr.mxu0 0.0
      %199 = vmatpush1.msra.mxu0 0.0
      %200 = vmatprep.subr.mxu0 0.0
      %201 = vmatpush1.msra.mxu0 0.0
      %202 = vmatprep.subr.mxu0 0.0
      %203 = vmatpush1.msra.mxu0 0.0
      %204 = vmatprep.subr.mxu0 0.0
      %205 = vmatpush1.msra.mxu0 0.0
      %206 = vmatprep.subr.mxu0 0.0
      %207 = vmatpush1.msra.mxu0 0.0
      %208 = vmatprep.subr.mxu0 0.0
      %209 = vmatpush1.msra.mxu0 0.0
      %210 = vmatprep.subr.mxu0 0.0
      %211 = vmatpush1.msra.mxu0 0.0
      %212 = vmatprep.subr.mxu0 0.0
      %213 = vmatpush1.msra.mxu0 0.0
      %214 = vmatprep.subr.mxu0 0.0
      %215 = vmatpush1.msra.mxu0 0.0
      %216 = vmatprep.subr.mxu0 0.0
      %217 = vmatpush1.msra.mxu0 0.0
      %218 = vmatprep.subr.mxu0 0.0
      %219 = vmatpush1.msra.mxu0 0.0
      %220 = vmatprep.subr.mxu0 0.0
      %221 = vmatpush1.msra.mxu0 0.0
      %222 = vmatprep.subr.mxu0 0.0
      %223 = vmatpush1.msra.mxu0 0.0
      %224 = vmatprep.subr.mxu0 0.0
      %225 = vmatpush1.msra.mxu0 0.0
      %226 = vmatprep.subr.mxu0 0.0
      %227 = vmatpush1.msra.mxu0 0.0
      %228 = vmatprep.subr.mxu0 0.0
      %229 = vmatpush1.msra.mxu0 0.0
      %230 = vmatprep.subr.mxu0 0.0
      %231 = vmatpush1.msra.mxu0 0.0
      %232 = vmatprep.subr.mxu0 0.0
      %233 = vmatpush1.msra.mxu0 0.0
      %234 = vmatprep.subr.mxu0 0.0
      %235 = vmatpush1.msra.mxu0 0.0
      %236 = vmatprep.subr.mxu0 0.0
      %237 = vmatpush1.msra.mxu0 0.0
      %238 = vmatprep.subr.mxu0 0.0
      %239 = vmatpush1.msra.mxu0 0.0
      %240 = vmatprep.subr.mxu0 0.0
      %241 = vmatpush1.msra.mxu0 0.0
      %242 = vmatprep.mubr.f32.mxu0 0.0
      %243 = vmatmul.mubr.f32.gmra.mrb[0].mxu0 %v176
      %v244 = vpop.f32.mrb[0].mxu0
      %v245 = vadd.f32 %v173, %v244
      %v246 = vpop.f32.mrb[0].mxu0
      %247 = vdwg.mxu0
      %v248 = vtanh.pop %v245
      %v249 = vld [vmem:[#allocation8] sm:$0xff]
      %v250 = vld [vmem:[#allocation8 + $0x8] sm:$0xff]
      %v251 = vld [vmem:[#allocation8 + $0x10] sm:$0xff]
      %v252 = vld [vmem:[#allocation8 + $0x18] sm:$0xff]
      %v253 = vld [vmem:[#allocation8 + $0x20] sm:$0xff]
      %v254 = vld [vmem:[#allocation8 + $0x28] sm:$0xff]
      %v255 = vld [vmem:[#allocation8 + $0x30] sm:$0xff]
      %v256 = vld [vmem:[#allocation8 + $0x38] sm:$0xff]
      %v257 = vld [vmem:[#allocation8 + $0x40] sm:$0xff]
      %v258 = vld [vmem:[#allocation8 + $0x48] sm:$0xff]
      %v259 = vld [vmem:[#allocation8 + $0x50] sm:$0xff]
      %v260 = vld [vmem:[#allocation8 + $0x58] sm:$0xff]
      %v261 = vld [vmem:[#allocation8 + $0x60] sm:$0xff]
      %v262 = vld [vmem:[#allocation8 + $0x68] sm:$0xff]
      %v263 = vld [vmem:[#allocation8 + $0x70] sm:$0xff]
      %v264 = vld [vmem:[#allocation8 + $0x78] sm:$0xff]
      %v265 = vld [vmem:[%s4] sm:$0x1]
      %v267 = vlaneseq
      %v268 = vshrl.u32 %v267, 7
      %v269 = vsub.s32 0, %v268
      %v270 = vrot.slane %v265, %v269
      %272 = vmatprep.subr.mxu0 0.0
      %273 = vmatpush1.msra.mxu0 %v249
      %274 = vmatprep.subr.mxu0 0.0
      %275 = vmatpush1.msra.mxu0 %v250
      %276 = vmatprep.subr.mxu0 0.0
      %277 = vmatpush1.msra.mxu0 %v251
      %278 = vmatprep.subr.mxu0 0.0
      %279 = vmatpush1.msra.mxu0 %v252
      %280 = vmatprep.subr.mxu0 0.0
      %281 = vmatpush1.msra.mxu0 %v253
      %282 = vmatprep.subr.mxu0 0.0
      %283 = vmatpush1.msra.mxu0 %v254
      %284 = vmatprep.subr.mxu0 0.0
      %285 = vmatpush1.msra.mxu0 %v255
      %286 = vmatprep.subr.mxu0 0.0
      %287 = vmatpush1.msra.mxu0 %v256
      %288 = vmatprep.subr.mxu0 0.0
      %289 = vmatpush1.msra.mxu0 %v257
      %290 = vmatprep.subr.mxu0 0.0
      %291 = vmatpush1.msra.mxu0 %v258
      %292 = vmatprep.subr.mxu0 0.0
      %293 = vmatpush1.msra.mxu0 %v259
      %294 = vmatprep.subr.mxu0 0.0
      %295 = vmatpush1.msra.mxu0 %v260
      %296 = vmatprep.subr.mxu0 0.0
      %297 = vmatpush1.msra.mxu0 %v261
      %298 = vmatprep.subr.mxu0 0.0
      %299 = vmatpush1.msra.mxu0 %v262
      %300 = vmatprep.subr.mxu0 0.0
      %301 = vmatpush1.msra.mxu0 %v263
      %302 = vmatprep.subr.mxu0 0.0
      %303 = vmatpush1.msra.mxu0 %v264
      %304 = vmatprep.subr.mxu0 0.0
      %305 = vmatpush1.msra.mxu0 0.0
      %306 = vmatprep.subr.mxu0 0.0
      %307 = vmatpush1.msra.mxu0 0.0
      %308 = vmatprep.subr.mxu0 0.0
      %309 = vmatpush1.msra.mxu0 0.0
      %310 = vmatprep.subr.mxu0 0.0
      %311 = vmatpush1.msra.mxu0 0.0
      %312 = vmatprep.subr.mxu0 0.0
      %313 = vmatpush1.msra.mxu0 0.0
      %314 = vmatprep.subr.mxu0 0.0
      %315 = vmatpush1.msra.mxu0 0.0
      %316 = vmatprep.subr.mxu0 0.0
      %317 = vmatpush1.msra.mxu0 0.0
      %318 = vmatprep.subr.mxu0 0.0
      %319 = vmatpush1.msra.mxu0 0.0
      %320 = vmatprep.subr.mxu0 0.0
      %321 = vmatpush1.msra.mxu0 0.0
      %322 = vmatprep.subr.mxu0 0.0
      %323 = vmatpush1.msra.mxu0 0.0
      %324 = vmatprep.subr.mxu0 0.0
      %325 = vmatpush1.msra.mxu0 0.0
      %326 = vmatprep.subr.mxu0 0.0
      %327 = vmatpush1.msra.mxu0 0.0
      %328 = vmatprep.subr.mxu0 0.0
      %329 = vmatpush1.msra.mxu0 0.0
      %330 = vmatprep.subr.mxu0 0.0
      %331 = vmatpush1.msra.mxu0 0.0
      %332 = vmatprep.subr.mxu0 0.0
      %333 = vmatpush1.msra.mxu0 0.0
      %334 = vmatprep.subr.mxu0 0.0
      %335 = vmatpush1.msra.mxu0 0.0
      %336 = vmatprep.mubr.f32.mxu0 0.0
      %337 = vmatmul.mubr.f32.gmra.mrb[0].mxu0 %v248
      %v338 = vpop.f32.mrb[0].mxu0
      %v339 = vadd.f32 %v270, %v338
      %v340 = vpop.f32.mrb[0].mxu0
      %341 = vdwg.mxu0
      %342 = vst [vmem:[#allocation9] sm:$0xff] %v339
    $region41: #{tpu_custom_call.1} parent=1 // pred_fallthru
      _
    // Predicated region
    $region42: #{tpu_custom_call.1} parent=1 // pred_check
      _
    $region43: #{tpu_custom_call.1} parent=1 // pred_check_branch
      %344 = sbr.rel (0) target = $region45
    $region44: #{tpu_custom_call.1} parent=1 // pred_region
      %s346 = ssub.s32 128, 32
      %347 = vsyncadd [#allocation5], %s346
      %s348 = sshll.u32 [#allocation9], 4
      %s349 = int_to_ptr.vmem [resolvable:$true] %s348
      %354 = dma.vmem_to_hbm [thread:$0]  %s349, 32, %s5, [#allocation5], 32, 32, 2
    $region45: #{tpu_custom_call.1} parent=1 // pred_fallthru
      _
    // Predicated region
    $region46: #{tpu_custom_call.1} parent=1 // pred_check
      _
    $region47: #{tpu_custom_call.1} parent=1 // pred_check_branch
      %356 = sbr.rel (0) target = $region49
    $region48: #{tpu_custom_call.1} parent=1 // pred_region
      %357 = dma.done [#allocation5], 128
    $region49: #{tpu_custom_call.1} parent=1 // pred_fallthru
      _
    %358 = vsyncpa [#allocation4], 1
    %359 = vsyncpa [#allocation7], 1
    %360 = vsyncpa [#allocation5], 1

</llo_original>
